<compile_context>
chip_gen: v7x
topology: tpu7x:2x2x1
jax: 0.10.0
libtpu: 0.0.40
codegen_flags: <defaults>
</compile_context>

<pallas_src>
import functools

import jax
import jax.numpy as jnp
from jax.experimental import pallas as pl
from jax.experimental.pallas import tpu as pltpu

_IGNORE_INDEX = -100


def _round_up(x, m):
    return (x + m - 1) // m * m


def _tpu_vmem_capacity_bytes():
    """Per-core VMEM capacity; conservative (v7x-sized) fallback."""
    try:
        return int(pltpu.get_tpu_info().vmem_capacity_bytes)
    except Exception:
        return 64 << 20


# ---------------------------------------------------------------------------
# Kernels
# ---------------------------------------------------------------------------
def _ce_kernel_single(logits_ref, labels_ref, out_ref, *, vocab_size):
    """Fast path: full vocab in one tile.  Grid = (row_tiles,).

    No online-logsumexp carry, no scratch.  Writes the per-row-tile partial
    (loss_sum, valid_count) pair to SMEM.
    """
    del vocab_size  # the vocab block is exactly the full vocab: no lane mask
    x = logits_ref[...].astype(jnp.float32)                    # (TM, V)
    lbl = labels_ref[...]                                       # (TM, 1) int32

    m = jnp.max(x, axis=-1, keepdims=True)
    l = jnp.sum(jnp.exp(x - m), axis=-1, keepdims=True)

    lane = jax.lax.broadcasted_iota(jnp.int32, x.shape, 1)
    g = jnp.sum(jnp.where(lane == lbl, x, 0.0), axis=-1, keepdims=True)

    valid = lbl != _IGNORE_INDEX                                # (TM, 1) bool
    per_row = jnp.where(valid, (m + jnp.log(l)) - g, 0.0)       # padded rows -> 0
    out_ref[0, 0] = jnp.sum(per_row)
    out_ref[0, 1] = jnp.sum(valid.astype(jnp.float32))


def _ce_kernel_tiled(logits_ref, labels_ref, out_ref, m_ref, l_ref, g_ref, *,
                     vocab_size, vocab_tile):
    """General path.  Grid = (row_tiles, vocab_tiles); vocab is the inner axis.

    Online logsumexp across vocab tiles; per-row running state lives in VMEM
    scratch (m = running max, l = running exp-sum, g = gathered label logit).
    On the last vocab step the per-row-tile partial loss sum / valid count are
    written to SMEM; the final reduction happens outside the kernel.
    """
    v = pl.program_id(1)

    @pl.when(v == 0)
    def _():
        m_ref[...] = jnp.full_like(m_ref, -jnp.inf)
        l_ref[...] = jnp.zeros_like(l_ref)
        g_ref[...] = jnp.zeros_like(g_ref)

    x = logits_ref[...].astype(jnp.float32)                     # (TM, TV)
    lbl = labels_ref[...]                                        # (TM, 1) int32
    lane = jax.lax.broadcasted_iota(jnp.int32, x.shape, 1)       # local lane id

    if vocab_size % vocab_tile != 0:
        # Ragged last vocab tile only: mask lanes past the vocab end.  On all
        # other tiles `limit >= vocab_tile`, so the select is a no-op; in the
        # common (divisible) case this whole block is compiled out.
        limit = vocab_size - v * vocab_tile
        xm = jnp.where(lane < limit, x, -jnp.inf)
    else:
        xm = x

    # online (running) logsumexp update
    m_prev = m_ref[...]
    m_new = jnp.maximum(m_prev, jnp.max(xm, axis=-1, keepdims=True))
    alpha = jnp.exp(m_prev - m_new)
    l_ref[...] = alpha * l_ref[...] + jnp.sum(jnp.exp(xm - m_new),
                                              axis=-1, keepdims=True)
    m_ref[...] = m_new

    # Gather the label logit: compare the local lane iota against a per-row
    # local label index (one (TM,1) subtract instead of a per-element add).
    lbl_local = lbl - v * vocab_tile
    g_ref[...] += jnp.sum(jnp.where(lane == lbl_local, x, 0.0),
                          axis=-1, keepdims=True)

    @pl.when(v == pl.num_programs(1) - 1)
    def _():
        valid = lbl != _IGNORE_INDEX
        per_row = (m_ref[...] + jnp.log(l_ref[...])) - g_ref[...]
        per_row = jnp.where(valid, per_row, 0.0)                # padded rows -> 0
        out_ref[0, 0] = jnp.sum(per_row)
        out_ref[0, 1] = jnp.sum(valid.astype(jnp.float32))


# ---------------------------------------------------------------------------
# Wrapper
# ---------------------------------------------------------------------------
@functools.partial(jax.jit, static_argnames=("tm", "tv", "vmem_limit"))
def _gpt_lm_loss_impl(logits, labels, *, tm, tv, vmem_limit):
    B, S, V = logits.shape
    NR = B * S
    itemsize = jnp.dtype(logits.dtype).itemsize
    r_tiles = pl.cdiv(NR, tm)
    v_tiles = pl.cdiv(V, tv)
    NRP = r_tiles * tm

    # ---- inputs (no logits copies) ---------------------------------------
    # (B, S, V) -> (B*S, V) is a free contiguous reshape.  The shift lives in
    # the label array only: row r targets labels_flat[r + 1]; rows at the end
    # of each sequence (and row-tile padding) get ignore_index.
    logits2d = logits.reshape(NR, V)
    labels_flat = labels.reshape(-1).astype(jnp.int32)
    shifted = jnp.concatenate(
        [labels_flat[1:], jnp.full((1,), _IGNORE_INDEX, jnp.int32)])
    pos = jnp.arange(NR, dtype=jnp.int32) % S
    shifted = jnp.where(pos == S - 1, jnp.int32(_IGNORE_INDEX), shifted)
    shifted = jnp.pad(shifted, (0, NRP - NR), constant_values=_IGNORE_INDEX)
    labels2d = shifted.reshape(NRP, 1)

    cost = pl.CostEstimate(
        flops=5 * NR * V,
        transcendentals=NR * V,
        bytes_accessed=NR * V * itemsize + NRP * 4 + r_tiles * 8,
    )
    out_shape = jax.ShapeDtypeStruct((r_tiles, 2), jnp.float32)

    if v_tiles == 1:
        # Single vocab pass: no online carry, no scratch.
        grid_spec = pltpu.PrefetchScalarGridSpec(
            num_scalar_prefetch=0,
            grid=(r_tiles,),
            in_specs=[
                pl.BlockSpec((tm, tv), lambda r: (r, 0)),
                pl.BlockSpec((tm, 1), lambda r: (r, 0)),
            ],
            out_specs=pl.BlockSpec((1, 2), lambda r: (r, 0),
                                   memory_space=pltpu.MemorySpace.SMEM),
        )
        kernel = functools.partial(_ce_kernel_single, vocab_size=V)
        dims = ("parallel",)
    else:
        grid_spec = pltpu.PrefetchScalarGridSpec(
            num_scalar_prefetch=0,
            grid=(r_tiles, v_tiles),
            in_specs=[
                pl.BlockSpec((tm, tv), lambda r, v: (r, v)),
                pl.BlockSpec((tm, 1), lambda r, v: (r, 0)),
            ],
            out_specs=pl.BlockSpec((1, 2), lambda r, v: (r, 0),
                                   memory_space=pltpu.MemorySpace.SMEM),
            scratch_shapes=[
                pltpu.VMEM((tm, 1), jnp.float32),   # running max
                pltpu.VMEM((tm, 1), jnp.float32),   # running exp-sum
                pltpu.VMEM((tm, 1), jnp.float32),   # gathered label logit
            ],
        )
        kernel = functools.partial(_ce_kernel_tiled, vocab_size=V, vocab_tile=tv)
        # TODO(synk): on v7x verify the row axis shards across both TensorCores
        # in the trace; if not, switch axis 0 to pltpu.CORE_PARALLEL.
        dims = ("parallel", "arbitrary")

    partials = pl.pallas_call(
        kernel,
        out_shape=out_shape,
        grid_spec=grid_spec,
        compiler_params=pltpu.CompilerParams(
            dimension_semantics=dims,
            vmem_limit_bytes=vmem_limit),
        cost_estimate=cost,
    )(logits2d, labels2d)

    # Final reduction + divide in plain JAX (keeps the row axis parallel).
    # NOTE: if every target is ignore_index this is 0/0 = NaN (matches torch).
    return partials[:, 0].sum() / partials[:, 1].sum()


def gpt_lm_loss(logits, labels, *, row_tile=256, max_tile_bytes=None):
    """logits: (B, S, V) float; labels: (B, S) int.  Returns scalar f32 loss."""
    B, S, V = logits.shape
    NR = B * S
    itemsize = jnp.dtype(logits.dtype).itemsize

    vmem_cap = _tpu_vmem_capacity_bytes()
    if max_tile_bytes is None:
        # Per-buffer logits tile budget: ~16 MiB on v5e/v6e (128 MiB VMEM),
        # ~8 MiB on v7x (64 MiB VMEM).  Double-buffered, this stays well
        # inside the scoped-VMEM limit requested below.
        max_tile_bytes = max(4 << 20, vmem_cap // 8)

    # Row tile: multiple of 16 sublanes (valid for bf16 packing too).
    tm = min(_round_up(row_tile, 16), _round_up(NR, 16))
    # Vocab tile: multiple-of-128 lanes sized to the per-buffer byte budget.
    max_tv = max(128, (max_tile_bytes // (tm * itemsize)) // 128 * 128)
    if V <= max_tv:
        tv = V          # single vocab pass: online-logsumexp carry eliminated
        # Grow the row tile (up to 512) while the tile still fits the budget:
        # fewer grid steps -> less per-step overhead.
        tm_cap = min(512, _round_up(NR, 16))
        while tm * 2 <= tm_cap and tm * 2 * tv * itemsize <= max_tile_bytes:
            tm *= 2
    else:
        tv = max_tv

    # Double-buffered logits tile + labels/scratch/headroom, capped per chip.
    vmem_limit = int(min(vmem_cap // 2,
                         max(2 * tm * tv * itemsize + (8 << 20), 16 << 20)))

    return _gpt_lm_loss_impl(logits, labels, tm=tm, tv=tv,
                             vmem_limit=vmem_limit)


# ---------------------------------------------------------------------------
# Reference + self-test
# ---------------------------------------------------------------------------
def _reference(logits, labels):
    V = logits.shape[-1]
    sl = logits[:, :-1, :].reshape(-1, V).astype(jnp.float32)
    tl = labels[:, 1:].reshape(-1)
    logp = jax.nn.log_softmax(sl, axis=-1)
    nll = -jnp.take_along_axis(logp, tl[:, None], axis=-1)[:, 0]
    return jnp.mean(nll)


if __name__ == "__main__":
    key = jax.random.PRNGKey(0)
    k1, k2, k3, k4, k5, k6 = jax.random.split(key, 6)

    # case 1: small GPT-like shapes -> single-vocab-tile fast path
    B, S, V = 2, 8, 32
    logits = jax.random.normal(k1, (B, S, V), dtype=jnp.float32)
    labels = jax.random.randint(k2, (B, S), 0, V, dtype=jnp.int32)
    loss = gpt_lm_loss(logits, labels)
    jax.block_until_ready(loss)
    ref = _reference(logits, labels)
    assert jnp.allclose(loss, ref, rtol=1e-5, atol=1e-5), (loss, ref)

    # case 2: forces vocab tiling (online logsumexp) + ragged row tile
    B2, S2, V2 = 3, 5, 384
    logits2 = jax.random.normal(k3, (B2, S2, V2), dtype=jnp.float32)
    labels2 = jax.random.randint(k4, (B2, S2), 0, V2, dtype=jnp.int32)
    loss2 = gpt_lm_loss(logits2, labels2, max_tile_bytes=8192)
    jax.block_until_ready(loss2)
    ref2 = _reference(logits2, labels2)
    assert jnp.allclose(loss2, ref2, rtol=1e-5, atol=1e-5), (loss2, ref2)

    # case 3: ragged last vocab tile (V % tv != 0) + ragged row tile
    B3, S3, V3 = 2, 7, 320
    logits3 = jax.random.normal(k5, (B3, S3, V3), dtype=jnp.float32)
    labels3 = jax.random.randint(k6, (B3, S3), 0, V3, dtype=jnp.int32)
    loss3 = gpt_lm_loss(logits3, labels3, max_tile_bytes=8192)
    jax.block_until_ready(loss3)
    ref3 = _reference(logits3, labels3)
    assert jnp.allclose(loss3, ref3, rtol=1e-5, atol=1e-5), (loss3, ref3)

    print("KERNEL_OK")
</pallas_src>

<mosaic_0001>
module attributes {stable_mosaic.version = 11 : i64} {
  func.func @_ce_kernel_single(%arg0: i32, %arg1: memref<16x32xf32, #tpu.memory_space<vmem>>, %arg2: memref<16x1xi32, #tpu.memory_space<vmem>>, %arg3: memref<1x2xf32, #tpu.memory_space<smem>>) attributes {dimension_semantics = [#tpu.dimension_semantics<parallel>], iteration_bounds = array<i64: 1>, scalar_prefetch = 0 : i64, scratch_operands = 0 : i64, tpu.core_type = #tpu.core_type<tc>, window_params = [{transform_indices = @transform_0, window_bounds = array<i64: 16, 32>}, {transform_indices = @transform_1, window_bounds = array<i64: 16, 1>}, {transform_indices = @transform_2, window_bounds = array<i64: 1, 2>}]} {
    %c0 = arith.constant 0 : index
    %c0_0 = arith.constant 0 : index
    %0 = vector.load %arg1[%c0, %c0_0] : memref<16x32xf32, #tpu.memory_space<vmem>>, vector<16x32xf32>
    %c0_1 = arith.constant 0 : index
    %c0_2 = arith.constant 0 : index
    %1 = vector.load %arg2[%c0_1, %c0_2] : memref<16x1xi32, #tpu.memory_space<vmem>>, vector<16x1xi32>
    %cst = arith.constant dense<0xFF800000> : vector<16xf32>
    %2 = vector.multi_reduction <maximumf>, %0, %cst [1] : vector<16x32xf32> to vector<16xf32>
    %3 = vector.shape_cast %2 : vector<16xf32> to vector<16x1xf32>
    %4 = vector.broadcast %3 : vector<16x1xf32> to vector<16x32xf32>
    %5 = arith.subf %0, %4 : vector<16x32xf32>
    %6 = math.exp %5 : vector<16x32xf32>
    %cst_3 = arith.constant dense<0.000000e+00> : vector<16xf32>
    %7 = vector.multi_reduction <add>, %6, %cst_3 [1] : vector<16x32xf32> to vector<16xf32>
    %8 = vector.shape_cast %7 : vector<16xf32> to vector<16x1xf32>
    %9 = tpu.iota {dimensions = array<i32: 1>} : vector<16x32xi32>
    %10 = vector.broadcast %1 : vector<16x1xi32> to vector<16x32xi32>
    %11 = arith.cmpi eq, %9, %10 : vector<16x32xi32>
    %cst_4 = arith.constant 0.000000e+00 : f32
    %12 = vector.broadcast %cst_4 : f32 to vector<16x32xf32>
    %13 = arith.select %11, %0, %12 : vector<16x32xi1>, vector<16x32xf32>
    %cst_5 = arith.constant dense<0.000000e+00> : vector<16xf32>
    %14 = vector.multi_reduction <add>, %13, %cst_5 [1] : vector<16x32xf32> to vector<16xf32>
    %15 = vector.shape_cast %14 : vector<16xf32> to vector<16x1xf32>
    %c-100_i32 = arith.constant -100 : i32
    %16 = vector.broadcast %c-100_i32 : i32 to vector<16x1xi32>
    %17 = arith.cmpi ne, %1, %16 : vector<16x1xi32>
    %18 = math.log %8 : vector<16x1xf32>
    %19 = arith.addf %3, %18 : vector<16x1xf32>
    %20 = arith.subf %19, %15 : vector<16x1xf32>
    %cst_6 = arith.constant 0.000000e+00 : f32
    %21 = vector.broadcast %cst_6 : f32 to vector<16x1xf32>
    %22 = arith.select %17, %20, %21 : vector<16x1xi1>, vector<16x1xf32>
    %23 = vector.shape_cast %22 : vector<16x1xf32> to vector<1x16x1xf32>
    %cst_7 = arith.constant dense<0.000000e+00> : vector<1xf32>
    %24 = vector.multi_reduction <add>, %23, %cst_7 [1, 2] : vector<1x16x1xf32> to vector<1xf32>
    %25 = vector.shape_cast %24 : vector<1xf32> to vector<1x1x1xf32>
    %26 = vector.extract %25[0, 0, 0] : f32 from vector<1x1x1xf32>
    %c0_8 = arith.constant 0 : index
    %c0_9 = arith.constant 0 : index
    %27 = memref.load %arg3[%c0_8, %c0_9] : memref<1x2xf32, #tpu.memory_space<smem>>
    memref.store %26, %arg3[%c0_8, %c0_9] : memref<1x2xf32, #tpu.memory_space<smem>>
    %28 = arith.extui %17 : vector<16x1xi1> to vector<16x1xi32>
    %29 = arith.sitofp %28 : vector<16x1xi32> to vector<16x1xf32>
    %30 = vector.shape_cast %29 : vector<16x1xf32> to vector<1x16x1xf32>
    %cst_10 = arith.constant dense<0.000000e+00> : vector<1xf32>
    %31 = vector.multi_reduction <add>, %30, %cst_10 [1, 2] : vector<1x16x1xf32> to vector<1xf32>
    %32 = vector.shape_cast %31 : vector<1xf32> to vector<1x1x1xf32>
    %33 = vector.extract %32[0, 0, 0] : f32 from vector<1x1x1xf32>
    %c0_11 = arith.constant 0 : index
    %c1 = arith.constant 1 : index
    %34 = memref.load %arg3[%c0_11, %c1] : memref<1x2xf32, #tpu.memory_space<smem>>
    memref.store %33, %arg3[%c0_11, %c1] : memref<1x2xf32, #tpu.memory_space<smem>>
    return
  }
  func.func @transform_0(%arg0: i32) -> (i32, i32) {
    %c0_i32 = arith.constant 0 : i32
    %c0_i32_0 = arith.constant 0 : i32
    return %arg0, %c0_i32 : i32, i32
  }
  func.func @transform_1(%arg0: i32) -> (i32, i32) {
    %c0_i32 = arith.constant 0 : i32
    %c0_i32_0 = arith.constant 0 : i32
    return %arg0, %c0_i32 : i32, i32
  }
  func.func @transform_2(%arg0: i32) -> (i32, i32) {
    %c0_i32 = arith.constant 0 : i32
    %c0_i32_0 = arith.constant 0 : i32
    return %arg0, %c0_i32 : i32, i32
  }
}

</mosaic_0001>

<llo_original>
// kernel: _gpt_lm_loss_impl.1
$region0: #{_gpt_lm_loss_impl.1}
  #allocation0 [shape = 'u32[]', space=smem, size = 0x4, offset = 0x4, fixed_abs, tag = 'smem constant byte address 0x4 - core index']
  #allocation1 [shape = 'u32[144,128]{1,0:T(1,128)}', space=vmem, size = 0x12000, scoped, tag = 'internal scratch']
  %s0 = inlined_call_operand.vmem [shape: f32[16,32], index: 0, kind: input, shape index: {}]
  %s1 = inlined_call_operand.vmem [shape: s32[16,1], index: 1, kind: input, shape index: {}]
  %s2 = inlined_call_operand.vmem [shape: f32[1,2], index: 2, kind: output, shape index: {}]
  %s3 = sld [smem:[#allocation0]]
  $region18: #{_gpt_lm_loss_impl.1} parent=0
    _
  %s5 = ssub.s32 1, %s3
  %s6 = scalar_select 0, %s5, %s3
  $region1: #{_gpt_lm_loss_impl.1} parent=0
    #allocation2 [shape = 'u8[512]{0}', space=smem, size = 0x200, scoped, tag = 'output window, operand 0, single buffered']
    #allocation3 [shape = 's32[1]{0}', space=sflag, size = 0x4, scoped, tag = 'scoped memory for _gpt_lm_loss_impl.1']
    %7 = vsyncpa [#allocation3], 0
    // Predicated region
    $region2: #{_gpt_lm_loss_impl.1} parent=1 // pred_check
      _
    $region3: #{_gpt_lm_loss_impl.1} parent=1 // pred_check_branch
      %9 = sbr.rel (0) target = $region5
    $region4: #{_gpt_lm_loss_impl.1} parent=1 // pred_region
      _
    $region5: #{_gpt_lm_loss_impl.1} parent=1 // pred_fallthru
      _
    // Predicated region
    $region6: #{_gpt_lm_loss_impl.1} parent=1 // pred_check
      _
    $region7: #{_gpt_lm_loss_impl.1} parent=1 // pred_check_branch
      %11 = sbr.rel (0) target = $region9
    $region8: #{_gpt_lm_loss_impl.1} parent=1 // pred_region
      _
    $region9: #{_gpt_lm_loss_impl.1} parent=1 // pred_fallthru
      _
    %v12 = vld [vmem:[%s0] sm:$0xff]
    %v13 = vld [vmem:[%s0 + $0x8] sm:$0xff]
    %v14 = vld [vmem:[%s1] sm:$0xff]
    %v15 = vld [vmem:[%s1 + $0x8] sm:$0xff]
    %vm16 = vcmask 261120
    %v17 = vsel %vm16, %v12, -inf
    %18 = vmax.xlane.f32.xlu0 %v17
    %v19 = vpop.xlane.xlu0 %18
    %v20 = vsel %vm16, %v13, -inf
    %21 = vmax.xlane.f32.xlu0 %v20
    %v22 = vpop.xlane.xlu0 %21
    %v23 = vsub.f32 %v12, %v19
    %v24 = vsub.f32 %v13, %v22
    %v25 = vmul.f32 %v23, 1.442695
    %v26 = vpow.pop %v25
    %v27 = vmul.f32 %v24, 1.442695
    %v28 = vpow.pop %v27
    %v29 = vsel %vm16, %v26, 0.0
    %30 = vadd.xlane.f32.xlu0 %v29
    %v31 = vpop.xlane.xlu0 %30
    %v32 = vsel %vm16, %v28, 0.0
    %33 = vadd.xlane.f32.xlu0 %v32
    %v34 = vpop.xlane.xlu0 %33
    %v35 = vlaneseq
    %v36 = vand.u32 %v35, 127
    %37 = vset.pattern.permute.xlu0 0
    %38 = vperm.xlu0 %37, %v14
    %v39 = vpop.permute.xlu0 %38
    %40 = vset.pattern.permute.xlu0 0
    %41 = vperm.xlu0 %40, %v15
    %v42 = vpop.permute.xlu0 %41
    %vm43 = vcmp.eq.s32.totalorder %v36, %v39
    %vm44 = vcmp.eq.s32.totalorder %v36, %v42
    %v45 = vsel %vm43, %v12, 0.0
    %v46 = vsel %vm44, %v13, 0.0
    %v47 = vsel %vm16, %v45, 0.0
    %48 = vadd.xlane.f32.xlu0 %v47
    %v49 = vpop.xlane.xlu0 %48
    %v50 = vsel %vm16, %v46, 0.0
    %51 = vadd.xlane.f32.xlu0 %v50
    %v52 = vpop.xlane.xlu0 %51
    %vm53 = vcmp.ne.s32.totalorder %v14, 4294967196
    %vm54 = vcmp.ne.s32.totalorder %v15, 4294967196
    %v55 = vlog2.pop %v31
    %v56 = vmul.f32 %v55, 0.6931472
    %v57 = vlog2.pop %v34
    %v58 = vmul.f32 %v57, 0.6931472
    %v59 = vadd.f32 %v19, %v56
    %v60 = vadd.f32 %v22, %v58
    %v61 = vsub.f32 %v59, %v49
    %v62 = vsub.f32 %v60, %v52
    %v63 = vsel %vm53, %v61, 0.0
    %v64 = vsel %vm54, %v62, 0.0
    %vm65 = vcmask 7168
    %v66 = vsel %vm65, %v63, 0.0
    %v67 = vsel %vm65, %v64, 0.0
    %v68 = vadd.f32 %v66, %v67
    %69 = vadd.xlane.f32.xlu0 %v68
    %v70 = vpop.xlane.xlu0 %69
    %v71 = vrot.slane %v70, 4
    %v72 = vadd.f32 %v70, %v71
    %v73 = vrot.slane %v72, 2
    %v74 = vadd.f32 %v72, %v73
    %v75 = vrot.slane %v74, 1
    %v76 = vadd.f32 %v74, %v75
    %s77 = vtos %v76
    %s78 = scalar_lea.smem [#allocation2], 0
    %79 = sst [smem:[%s78]] %s77
    %v80 = vsel %vm53, 1, 0
    %v81 = vsel %vm54, 1, 0
    %v82 = vcvt.s32.f32 %v80
    %v83 = vcvt.s32.f32 %v81
    %v84 = vsel %vm65, %v82, 0.0
    %v85 = vsel %vm65, %v83, 0.0
    %v86 = vadd.f32 %v84, %v85
    %87 = vadd.xlane.f32.xlu0 %v86
    %v88 = vpop.xlane.xlu0 %87
    %v89 = vrot.slane %v88, 4
    %v90 = vadd.f32 %v88, %v89
    %v91 = vrot.slane %v90, 2
    %v92 = vadd.f32 %v90, %v91
    %v93 = vrot.slane %v92, 1
    %v94 = vadd.f32 %v92, %v93
    %s95 = vtos %v94
    %s96 = scalar_lea.smem [#allocation2], 1
    %97 = sst [smem:[%s96]] %s95
    // Predicated region
    $region10: #{_gpt_lm_loss_impl.1} parent=1 // pred_check
      _
    $region11: #{_gpt_lm_loss_impl.1} parent=1 // pred_check_branch
      %99 = sbr.rel (0) target = $region13
    $region12: #{_gpt_lm_loss_impl.1} parent=1 // pred_region
      %s101 = ssub.s32 16, 16
      %102 = vsyncadd [#allocation3], %s101
      %s104 = sshll.u32 %s2, 4
      %s105 = int_to_ptr.vmem [resolvable:$true] %s104
      %107 = dma.smem_to_vmem [#allocation2], 16, %s105, [#allocation3]
    $region13: #{_gpt_lm_loss_impl.1} parent=1 // pred_fallthru
      _
    // Predicated region
    $region14: #{_gpt_lm_loss_impl.1} parent=1 // pred_check
      _
    $region15: #{_gpt_lm_loss_impl.1} parent=1 // pred_check_branch
      %109 = sbr.rel (0) target = $region17
    $region16: #{_gpt_lm_loss_impl.1} parent=1 // pred_region
      %110 = dma.done [#allocation3], 16
    $region17: #{_gpt_lm_loss_impl.1} parent=1 // pred_fallthru
      _
    %111 = sfence
    %112 = vsyncpa [#allocation3], 1

</llo_original>
